<compile_context>
chip_gen: v7x
topology: tpu7x:2x2x1
jax: 0.10.0
libtpu: 0.0.40
codegen_flags: <defaults>
</compile_context>

<pallas_src>
import functools
import math

import jax
import jax.numpy as jnp
from jax.experimental import pallas as pl
from jax.experimental.pallas import tpu as pltpu


_SELECT_GATHER_MAX = 32  # unrolled VPU-select gather up to this many gt boxes


def _noised_gt_kernel(scale_ref, gt_ref, idx_ref, t_ref, noise_ref, prior_ref,
                      *, gaussian_error: float, use_t: bool, max_gt: int):
    """One grid step == one image.  All arrays are lane-dense in P."""
    scale = scale_ref[...]                      # (4, 1)      f32  [w, h, w, h]
    gt = gt_ref[...]                            # (4, max_gt) f32
    idx = idx_ref[...]                          # (1, P)      i32
    noise = noise_ref[...]                      # (4, P)      f32
    num_prop = noise.shape[-1]

    # --- gather gt[:, idx] -> sampled (4, P) -------------------------------
    if max_gt <= _SELECT_GATHER_MAX:
        # Tiny N: unrolled VPU select/accumulate (no MXU, generation-neutral).
        sampled = jnp.zeros_like(noise)
        for n in range(max_gt):
            sampled = jnp.where(idx == n, gt[:, n:n + 1], sampled)
    else:
        # Larger N: lane-dense one-hot matmul (4,N) @ (N,P) -> (4,P).
        row_ids = jax.lax.broadcasted_iota(jnp.int32, (max_gt, num_prop), 0)
        onehot = (row_ids == idx).astype(jnp.float32)           # (max_gt, P)
        sampled = jnp.dot(gt, onehot, preferred_element_type=jnp.float32)

    # normalize to [0, 1] box space
    sampled = sampled / scale

    if use_t:
        t = t_ref[...].astype(jnp.float32)                      # (1, P)
        # sqrt(alpha_cumprod) = exp(0.5 * t * log(1 - ge)); alpha = sqrt^2.
        half_log_a = jnp.float32(0.5 * math.log(max(1.0 - gaussian_error, 1e-20)))
        sqrt_alpha = jnp.exp(t * half_log_a)                    # (1, P)
        sqrt_1m_alpha = jnp.sqrt(jnp.maximum(1.0 - sqrt_alpha * sqrt_alpha, 0.0))
        corrupted = sampled * sqrt_alpha + noise * sqrt_1m_alpha
    else:
        corrupted = (sampled * jnp.float32(math.sqrt(1.0 - gaussian_error))
                     + noise * jnp.float32(math.sqrt(gaussian_error)))

    # un-normalize back to pixel space (lane-dense unmasked store when P%128==0)
    prior_ref[...] = scale * corrupted


def _run_noised_gt(scale_b, gt_b, idx_b, t_b, noise_b, *, gaussian_error, use_t):
    """scale_b (B,4,1)  gt_b (B,4,max_gt)  idx_b/t_b (B,1,P)  noise_b (B,4,P)."""
    B, _, max_gt = gt_b.shape
    P = noise_b.shape[-1]
    kernel = functools.partial(_noised_gt_kernel,
                               gaussian_error=float(gaussian_error),
                               use_t=bool(use_t),
                               max_gt=int(max_gt))
    return pl.pallas_call(
        kernel,
        out_shape=jax.ShapeDtypeStruct((B, 4, P), jnp.float32),
        grid=(B,),
        in_specs=[
            pl.BlockSpec((None, 4, 1), lambda b: (b, 0, 0)),        # scale
            pl.BlockSpec((None, 4, max_gt), lambda b: (b, 0, 0)),   # gt (padded)
            pl.BlockSpec((None, 1, P), lambda b: (b, 0, 0)),        # idx
            pl.BlockSpec((None, 1, P), lambda b: (b, 0, 0)),        # t
            pl.BlockSpec((None, 4, P), lambda b: (b, 0, 0)),        # noise
        ],
        out_specs=pl.BlockSpec((None, 4, P), lambda b: (b, 0, 0)),
        compiler_params=pltpu.CompilerParams(
            dimension_semantics=("parallel",)),   # shards images across TCs on v7x
    )(scale_b, gt_b, idx_b, t_b, noise_b)


def noised_ground_truth(num_proposal_boxes, batched_inputs, *,
                        gaussian_error: float, use_t: bool, key):
    """Mirrors NoisedGroundTruth.forward over a python list of per-image dicts.

    All images with >0 gt boxes are processed by ONE batched pallas_call;
    zero-GT images take the (trivial) pure-JAX degenerate branch, matching the
    original module's python-level branch (prior = scale * (scale * randn))."""
    P = num_proposal_boxes
    outputs = [dict(bi) for bi in batched_inputs]

    gt_items = []  # (output_index, gt_boxes, scale_row, idx, t, noise)
    for i, bi in enumerate(batched_inputs):
        gt_boxes = jnp.asarray(bi['gt_boxes'], jnp.float32)      # (N, 4)
        h, w = bi['image'].shape[-2:]
        scale_row = jnp.array([w, h, w, h], dtype=jnp.float32)   # (4,)

        k_i = jax.random.fold_in(key, i)
        k_idx, k_t, k_noise = jax.random.split(k_i, 3)
        noise = jax.random.normal(k_noise, (P, 4), dtype=jnp.float32)

        num_gt = gt_boxes.shape[0]
        if num_gt > 0:
            idx = jax.random.randint(k_idx, (P,), 0, num_gt, dtype=jnp.int32)
            t = jax.random.randint(k_t, (P,), 0, 1000, dtype=jnp.int32)
            outputs[i]['original_gt'] = idx
            if use_t:
                outputs[i]['prior_t'] = t
            gt_items.append((i, gt_boxes, scale_row, idx, t, noise))
        else:
            # Degenerate "no ground truth" branch (matches the PyTorch module,
            # including the double application of scale).
            sr = scale_row[None, :]
            outputs[i]['proposal_boxes'] = sr * (sr * noise)
            if use_t:
                outputs[i]['prior_t'] = jnp.full((P,), 1000, dtype=jnp.int32)

    if gt_items:
        max_gt = max(item[1].shape[0] for item in gt_items)
        gt_b = jnp.stack([
            jnp.pad(item[1], ((0, max_gt - item[1].shape[0]), (0, 0))).T
            for item in gt_items])                                  # (B, 4, max_gt)
        scale_b = jnp.stack([item[2] for item in gt_items])[:, :, None]  # (B, 4, 1)
        idx_b = jnp.stack([item[3] for item in gt_items])[:, None, :]    # (B, 1, P)
        t_b = jnp.stack([item[4] for item in gt_items])[:, None, :]      # (B, 1, P)
        noise_b = jnp.stack([item[5].T for item in gt_items])            # (B, 4, P)

        prior_b = _run_noised_gt(scale_b, gt_b, idx_b, t_b, noise_b,
                                 gaussian_error=gaussian_error, use_t=use_t)
        for j, item in enumerate(gt_items):
            outputs[item[0]]['proposal_boxes'] = prior_b[j].T            # (P, 4)

    return outputs


def _reference_priors(num_proposal_boxes, batched_inputs, *,
                      gaussian_error, use_t, key):
    """Pure-JAX reference reproducing the PyTorch math (same random draws)."""
    P = num_proposal_boxes
    priors = []
    for i, bi in enumerate(batched_inputs):
        gt_boxes = jnp.asarray(bi['gt_boxes'], jnp.float32)
        h, w = bi['image'].shape[-2:]
        scale = jnp.array([[w, h, w, h]], dtype=jnp.float32)
        k_i = jax.random.fold_in(key, i)
        k_idx, k_t, k_noise = jax.random.split(k_i, 3)
        noise = jax.random.normal(k_noise, (P, 4), dtype=jnp.float32)
        num_gt = gt_boxes.shape[0]
        if num_gt > 0:
            idx = jax.random.randint(k_idx, (P,), 0, num_gt, dtype=jnp.int32)
            t = jax.random.randint(k_t, (P,), 0, 1000, dtype=jnp.int32)
            sampled = gt_boxes[idx] / scale
            if use_t:
                alpha = (1.0 - gaussian_error) ** t.astype(jnp.float32)[:, None]
                corrupted = sampled * jnp.sqrt(alpha) + noise * jnp.sqrt(1.0 - alpha)
            else:
                corrupted = (sampled * math.sqrt(1.0 - gaussian_error)
                             + noise * math.sqrt(gaussian_error))
            priors.append(scale * corrupted)
        else:
            priors.append(scale * (scale * noise))
    return priors


if __name__ == "__main__":
    key = jax.random.PRNGKey(0)
    k_img, k_box, k_run = jax.random.split(key, 3)

    # Small synthetic batch: 3 images of size 16x16 with 5, 3 and 0 gt boxes.
    gt_counts = [5, 3, 0]
    batched_inputs = []
    for i, n in enumerate(gt_counts):
        batched_inputs.append({
            'image': jax.random.normal(jax.random.fold_in(k_img, i),
                                       (3, 16, 16), dtype=jnp.float32),
            'gt_boxes': jax.random.uniform(jax.random.fold_in(k_box, i),
                                           (n, 4), minval=0.0, maxval=16.0,
                                           dtype=jnp.float32),
        })

    num_proposal_boxes = 128   # P on the 128-lane axis -> lane-dense stores
    gaussian_error = 0.1
    use_t = True

    results = noised_ground_truth(
        num_proposal_boxes, batched_inputs,
        gaussian_error=gaussian_error, use_t=use_t, key=k_run)
    refs = _reference_priors(
        num_proposal_boxes, batched_inputs,
        gaussian_error=gaussian_error, use_t=use_t, key=k_run)

    for i, (r, ref) in enumerate(zip(results, refs)):
        pb = jax.block_until_ready(r['proposal_boxes'])
        assert pb.shape == (num_proposal_boxes, 4)
        assert pb.dtype == jnp.float32
        assert bool(jnp.all(jnp.isfinite(pb)))
        assert r['prior_t'].shape == (num_proposal_boxes,)
        if gt_counts[i] > 0:
            assert r['original_gt'].shape == (num_proposal_boxes,)
        max_err = float(jnp.max(jnp.abs(pb - ref)))
        assert max_err < 1e-3, f"image {i}: max |err| = {max_err}"

    print("KERNEL_OK")
</pallas_src>

<mosaic_0001>
module attributes {stable_mosaic.version = 11 : i64} {
  func.func @_noised_gt_kernel(%arg0: i32, %arg1: memref<1x4x1xf32, #tpu.memory_space<vmem>>, %arg2: memref<1x4x5xf32, #tpu.memory_space<vmem>>, %arg3: memref<1x1x128xi32, #tpu.memory_space<vmem>>, %arg4: memref<1x1x128xi32, #tpu.memory_space<vmem>>, %arg5: memref<1x4x128xf32, #tpu.memory_space<vmem>>, %arg6: memref<1x4x128xf32, #tpu.memory_space<vmem>>) attributes {dimension_semantics = [#tpu.dimension_semantics<parallel>], iteration_bounds = array<i64: 2>, scalar_prefetch = 0 : i64, scratch_operands = 0 : i64, tpu.core_type = #tpu.core_type<tc>, window_params = [{transform_indices = @transform_0, window_bounds = array<i64: 1, 4, 1>}, {transform_indices = @transform_1, window_bounds = array<i64: 1, 4, 5>}, {transform_indices = @transform_2, window_bounds = array<i64: 1, 1, 128>}, {transform_indices = @transform_3, window_bounds = array<i64: 1, 1, 128>}, {transform_indices = @transform_4, window_bounds = array<i64: 1, 4, 128>}, {transform_indices = @transform_5, window_bounds = array<i64: 1, 4, 128>}]} {
    %c0 = arith.constant 0 : index
    %c0_0 = arith.constant 0 : index
    %c0_1 = arith.constant 0 : index
    %0 = vector.load %arg1[%c0, %c0_0, %c0_1] : memref<1x4x1xf32, #tpu.memory_space<vmem>>, vector<1x4x1xf32>
    %1 = vector.shape_cast %0 : vector<1x4x1xf32> to vector<4x1xf32>
    %c0_2 = arith.constant 0 : index
    %c0_3 = arith.constant 0 : index
    %c0_4 = arith.constant 0 : index
    %2 = vector.load %arg2[%c0_2, %c0_3, %c0_4] : memref<1x4x5xf32, #tpu.memory_space<vmem>>, vector<1x4x5xf32>
    %3 = vector.shape_cast %2 : vector<1x4x5xf32> to vector<4x5xf32>
    %c0_5 = arith.constant 0 : index
    %c0_6 = arith.constant 0 : index
    %c0_7 = arith.constant 0 : index
    %4 = vector.load %arg3[%c0_5, %c0_6, %c0_7] : memref<1x1x128xi32, #tpu.memory_space<vmem>>, vector<1x1x128xi32>
    %5 = vector.shape_cast %4 : vector<1x1x128xi32> to vector<1x128xi32>
    %c0_8 = arith.constant 0 : index
    %c0_9 = arith.constant 0 : index
    %c0_10 = arith.constant 0 : index
    %6 = vector.load %arg5[%c0_8, %c0_9, %c0_10] : memref<1x4x128xf32, #tpu.memory_space<vmem>>, vector<1x4x128xf32>
    %7 = vector.shape_cast %6 : vector<1x4x128xf32> to vector<4x128xf32>
    %cst = arith.constant 0.000000e+00 : f32
    %8 = vector.broadcast %cst : f32 to vector<4x128xf32>
    %c0_i32 = arith.constant 0 : i32
    %9 = vector.broadcast %c0_i32 : i32 to vector<1x128xi32>
    %10 = arith.cmpi eq, %5, %9 : vector<1x128xi32>
    %11 = vector.extract_strided_slice %3 {offsets = [0, 0], sizes = [4, 1], strides = [1, 1]} : vector<4x5xf32> to vector<4x1xf32>
    %12 = vector.shape_cast %10 : vector<1x128xi1> to vector<1x128xi1>
    %13 = vector.broadcast %12 : vector<1x128xi1> to vector<4x128xi1>
    %14 = vector.shape_cast %11 : vector<4x1xf32> to vector<4x1xf32>
    %15 = vector.broadcast %14 : vector<4x1xf32> to vector<4x128xf32>
    %16 = arith.select %13, %15, %8 : vector<4x128xi1>, vector<4x128xf32>
    %c1_i32 = arith.constant 1 : i32
    %17 = vector.broadcast %c1_i32 : i32 to vector<1x128xi32>
    %18 = arith.cmpi eq, %5, %17 : vector<1x128xi32>
    %19 = vector.extract_strided_slice %3 {offsets = [0, 1], sizes = [4, 1], strides = [1, 1]} : vector<4x5xf32> to vector<4x1xf32>
    %20 = vector.shape_cast %18 : vector<1x128xi1> to vector<1x128xi1>
    %21 = vector.broadcast %20 : vector<1x128xi1> to vector<4x128xi1>
    %22 = vector.shape_cast %19 : vector<4x1xf32> to vector<4x1xf32>
    %23 = vector.broadcast %22 : vector<4x1xf32> to vector<4x128xf32>
    %24 = arith.select %21, %23, %16 : vector<4x128xi1>, vector<4x128xf32>
    %c2_i32 = arith.constant 2 : i32
    %25 = vector.broadcast %c2_i32 : i32 to vector<1x128xi32>
    %26 = arith.cmpi eq, %5, %25 : vector<1x128xi32>
    %27 = vector.extract_strided_slice %3 {offsets = [0, 2], sizes = [4, 1], strides = [1, 1]} : vector<4x5xf32> to vector<4x1xf32>
    %28 = vector.shape_cast %26 : vector<1x128xi1> to vector<1x128xi1>
    %29 = vector.broadcast %28 : vector<1x128xi1> to vector<4x128xi1>
    %30 = vector.shape_cast %27 : vector<4x1xf32> to vector<4x1xf32>
    %31 = vector.broadcast %30 : vector<4x1xf32> to vector<4x128xf32>
    %32 = arith.select %29, %31, %24 : vector<4x128xi1>, vector<4x128xf32>
    %c3_i32 = arith.constant 3 : i32
    %33 = vector.broadcast %c3_i32 : i32 to vector<1x128xi32>
    %34 = arith.cmpi eq, %5, %33 : vector<1x128xi32>
    %35 = vector.extract_strided_slice %3 {offsets = [0, 3], sizes = [4, 1], strides = [1, 1]} : vector<4x5xf32> to vector<4x1xf32>
    %36 = vector.shape_cast %34 : vector<1x128xi1> to vector<1x128xi1>
    %37 = vector.broadcast %36 : vector<1x128xi1> to vector<4x128xi1>
    %38 = vector.shape_cast %35 : vector<4x1xf32> to vector<4x1xf32>
    %39 = vector.broadcast %38 : vector<4x1xf32> to vector<4x128xf32>
    %40 = arith.select %37, %39, %32 : vector<4x128xi1>, vector<4x128xf32>
    %c4_i32 = arith.constant 4 : i32
    %41 = vector.broadcast %c4_i32 : i32 to vector<1x128xi32>
    %42 = arith.cmpi eq, %5, %41 : vector<1x128xi32>
    %43 = vector.extract_strided_slice %3 {offsets = [0, 4], sizes = [4, 1], strides = [1, 1]} : vector<4x5xf32> to vector<4x1xf32>
    %44 = vector.shape_cast %42 : vector<1x128xi1> to vector<1x128xi1>
    %45 = vector.broadcast %44 : vector<1x128xi1> to vector<4x128xi1>
    %46 = vector.shape_cast %43 : vector<4x1xf32> to vector<4x1xf32>
    %47 = vector.broadcast %46 : vector<4x1xf32> to vector<4x128xf32>
    %48 = arith.select %45, %47, %40 : vector<4x128xi1>, vector<4x128xf32>
    %49 = vector.broadcast %1 : vector<4x1xf32> to vector<4x128xf32>
    %50 = arith.divf %48, %49 : vector<4x128xf32>
    %c0_11 = arith.constant 0 : index
    %c0_12 = arith.constant 0 : index
    %c0_13 = arith.constant 0 : index
    %51 = vector.load %arg4[%c0_11, %c0_12, %c0_13] : memref<1x1x128xi32, #tpu.memory_space<vmem>>, vector<1x1x128xi32>
    %52 = vector.shape_cast %51 : vector<1x1x128xi32> to vector<1x128xi32>
    %53 = arith.sitofp %52 : vector<1x128xi32> to vector<1x128xf32>
    %cst_14 = arith.constant -0.0526802577 : f32
    %54 = vector.broadcast %cst_14 : f32 to vector<1x128xf32>
    %55 = arith.mulf %53, %54 : vector<1x128xf32>
    %56 = math.exp %55 : vector<1x128xf32>
    %57 = arith.mulf %56, %56 : vector<1x128xf32>
    %cst_15 = arith.constant 1.000000e+00 : f32
    %58 = vector.broadcast %cst_15 : f32 to vector<1x128xf32>
    %59 = arith.subf %58, %57 : vector<1x128xf32>
    %cst_16 = arith.constant 0.000000e+00 : f32
    %60 = vector.broadcast %cst_16 : f32 to vector<1x128xf32>
    %61 = arith.maximumf %59, %60 : vector<1x128xf32>
    %62 = math.sqrt %61 : vector<1x128xf32>
    %63 = vector.broadcast %56 : vector<1x128xf32> to vector<4x128xf32>
    %64 = arith.mulf %50, %63 : vector<4x128xf32>
    %65 = vector.broadcast %62 : vector<1x128xf32> to vector<4x128xf32>
    %66 = arith.mulf %7, %65 : vector<4x128xf32>
    %67 = arith.addf %64, %66 : vector<4x128xf32>
    %68 = vector.broadcast %1 : vector<4x1xf32> to vector<4x128xf32>
    %69 = arith.mulf %68, %67 : vector<4x128xf32>
    %c0_17 = arith.constant 0 : index
    %c0_18 = arith.constant 0 : index
    %c0_19 = arith.constant 0 : index
    %70 = vector.load %arg6[%c0_17, %c0_18, %c0_19] : memref<1x4x128xf32, #tpu.memory_space<vmem>>, vector<1x4x128xf32>
    %71 = vector.shape_cast %70 : vector<1x4x128xf32> to vector<4x128xf32>
    %72 = vector.shape_cast %69 : vector<4x128xf32> to vector<1x4x128xf32>
    tpu.vector_store %arg6[%c0_17, %c0_18, %c0_19], %72 {strides = array<i32>} : memref<1x4x128xf32, #tpu.memory_space<vmem>>, vector<1x4x128xf32>,
    return
  }
  func.func @transform_0(%arg0: i32) -> (i32, i32, i32) {
    %c0_i32 = arith.constant 0 : i32
    %c0_i32_0 = arith.constant 0 : i32
    %c0_i32_1 = arith.constant 0 : i32
    return %arg0, %c0_i32, %c0_i32_0 : i32, i32, i32
  }
  func.func @transform_1(%arg0: i32) -> (i32, i32, i32) {
    %c0_i32 = arith.constant 0 : i32
    %c0_i32_0 = arith.constant 0 : i32
    %c0_i32_1 = arith.constant 0 : i32
    return %arg0, %c0_i32, %c0_i32_0 : i32, i32, i32
  }
  func.func @transform_2(%arg0: i32) -> (i32, i32, i32) {
    %c0_i32 = arith.constant 0 : i32
    %c0_i32_0 = arith.constant 0 : i32
    %c0_i32_1 = arith.constant 0 : i32
    return %arg0, %c0_i32, %c0_i32_0 : i32, i32, i32
  }
  func.func @transform_3(%arg0: i32) -> (i32, i32, i32) {
    %c0_i32 = arith.constant 0 : i32
    %c0_i32_0 = arith.constant 0 : i32
    %c0_i32_1 = arith.constant 0 : i32
    return %arg0, %c0_i32, %c0_i32_0 : i32, i32, i32
  }
  func.func @transform_4(%arg0: i32) -> (i32, i32, i32) {
    %c0_i32 = arith.constant 0 : i32
    %c0_i32_0 = arith.constant 0 : i32
    %c0_i32_1 = arith.constant 0 : i32
    return %arg0, %c0_i32, %c0_i32_0 : i32, i32, i32
  }
  func.func @transform_5(%arg0: i32) -> (i32, i32, i32) {
    %c0_i32 = arith.constant 0 : i32
    %c0_i32_0 = arith.constant 0 : i32
    %c0_i32_1 = arith.constant 0 : i32
    return %arg0, %c0_i32, %c0_i32_0 : i32, i32, i32
  }
}

</mosaic_0001>

<llo_original>
// kernel: tpu_custom_call.1
$region0: #{tpu_custom_call.1}
  #allocation0 [shape = 'u32[]', space=smem, size = 0x4, offset = 0x4, fixed_abs, tag = 'smem constant byte address 0x4 - core index']
  #allocation1 [shape = 'u32[144,128]{1,0:T(1,128)}', space=vmem, size = 0x12000, scoped, tag = 'internal scratch']
  %s0 = inlined_call_operand.vmem [shape: f32[2,4,1], index: 0, kind: input, shape index: {}]
  %s1 = inlined_call_operand.vmem [shape: f32[2,4,5], index: 1, kind: input, shape index: {}]
  %s2 = inlined_call_operand.hbm [shape: s32[2,1,128], index: 2, kind: input, shape index: {}]
  %s3 = inlined_call_operand.vmem [shape: s32[2,1,128], index: 3, kind: input, shape index: {}]
  %s4 = inlined_call_operand.vmem [shape: f32[2,4,128], index: 4, kind: input, shape index: {}]
  %s5 = inlined_call_operand.hbm [shape: f32[2,4,128], index: 5, kind: output, shape index: {}]
  %s6 = sld [smem:[#allocation0]]
  $region57: #{tpu_custom_call.1} parent=0
    _
  %s8 = ssub.s32 1, %s6
  %s9 = scalar_select 0, %s8, %s6
  $region1: #{tpu_custom_call.1} parent=0
    #allocation2 [shape = 'u8[1024]{0}', space=vmem, size = 0x400, scoped, tag = 'input window, operand 2']
    #allocation3 [shape = 's32[2]{0}', space=sflag, size = 0x8, scoped, tag = 'scoped memory for tpu_custom_call.1']
    #allocation4 [shape = 's32[2]{0}', space=sflag, size = 0x8, scoped, tag = 'scoped memory for tpu_custom_call.1']
    #allocation5 [shape = 'u8[4096]{0}', space=vmem, size = 0x1000, scoped, tag = 'output window, operand 0']
    %10 = vsyncpa [#allocation3], 0
    %s11 = scalar_lea.sflag [#allocation3], 1
    %12 = vsyncpa %s11, 0
    %13 = vsyncpa [#allocation4], 0
    %s14 = scalar_lea.sflag [#allocation4], 1
    %15 = vsyncpa %s14, 0
    loop: start=0, step=1, limit=4
    $region2: #{tpu_custom_call.1} parent=1 // loop_pre_header
      _
    $region3: #{tpu_custom_call.1} parent=1 // loop_header
      %s17 = sphi 0, %s21
      %p18 = scmp.ge.s32.totalorder %s17, 4
      %s27 = sphi 0, %s29
      %s30 = sphi 0, %s27
      %s31 = sphi 0, %s30
      %s47 = sphi 0, %s31
      %s53 = sphi 0, %s55
      %s56 = sphi 0, %s53
      %s57 = sphi 0, %s56
      %s73 = sphi 0, %s57
      %s79 = sphi 0, %s81
      %s82 = sphi 0, %s79
      %s83 = sphi 0, %s82
      %s99 = sphi 0, %s83
      %s105 = sphi 0, %s107
      %s108 = sphi 0, %s105
      %s109 = sphi 0, %s108
      %s125 = sphi 0, %s109
      %s131 = sphi 0, %s133
      %s134 = sphi 0, %s131
      %s135 = sphi 0, %s134
      %s151 = sphi 0, %s135
      %s157 = sphi 0, %s159
      %s160 = sphi 0, %s157
      %s161 = sphi 0, %s160
      %s177 = sphi 0, %s161
    $region4: #{tpu_custom_call.1} parent=1 // loop_header_branch
      %20 = sbr.rel (%p18) target = $region8
    $region5: #{tpu_custom_call.1} parent=1 // loop_body
      %s22 = ssub.s32 %s17, 1
      %s23 = ssub.s32 %s17, 2
      %s24 = sadd.s32 %s17, 1
      %s25 = ssub.s32 %s17, %s24
      %p26 = scmp.eq.s32.totalorder %s25, 0
      %s28 = sadd.s32 %s27, 1
      %s29 = scalar_select %p26, %s27, %s28
      %p32 = pneg %p26
      %p33 = scmp.eq.s32.totalorder %s17, 1
      %p34 = por %p32, %p33
      %p35 = scmp.ne.s32.totalorder %s27, %s30
      %p36 = scmp.eq.s32.totalorder %s17, 0
      %p37 = por %p35, %p36
      %p38 = scmp.ne.s32.totalorder %s27, %s30
      %p39 = scmp.eq.s32.totalorder %s22, 1
      %p40 = por %p38, %p39
      %p41 = scmp.ne.s32.totalorder %s30, %s31
      %p42 = scmp.eq.s32.totalorder %s22, 0
      %p43 = por %p41, %p42
      %p44 = scmp.ne.s32.totalorder %s30, %s31
      %p45 = scmp.eq.s32.totalorder %s23, 1
      %p46 = por %p44, %p45
      %p48 = scmp.ne.s32.totalorder %s31, %s47
      %p49 = scmp.eq.s32.totalorder %s23, 0
      %p50 = por %p48, %p49
      %s51 = ssub.s32 %s17, %s24
      %p52 = scmp.eq.s32.totalorder %s51, 0
      %s54 = sadd.s32 %s53, 1
      %s55 = scalar_select %p52, %s53, %s54
      %p58 = pneg %p52
      %p59 = scmp.eq.s32.totalorder %s17, 1
      %p60 = por %p58, %p59
      %p61 = scmp.ne.s32.totalorder %s53, %s56
      %p62 = scmp.eq.s32.totalorder %s17, 0
      %p63 = por %p61, %p62
      %p64 = scmp.ne.s32.totalorder %s53, %s56
      %p65 = scmp.eq.s32.totalorder %s22, 1
      %p66 = por %p64, %p65
      %p67 = scmp.ne.s32.totalorder %s56, %s57
      %p68 = scmp.eq.s32.totalorder %s22, 0
      %p69 = por %p67, %p68
      %p70 = scmp.ne.s32.totalorder %s56, %s57
      %p71 = scmp.eq.s32.totalorder %s23, 1
      %p72 = por %p70, %p71
      %p74 = scmp.ne.s32.totalorder %s57, %s73
      %p75 = scmp.eq.s32.totalorder %s23, 0
      %p76 = por %p74, %p75
      %s77 = ssub.s32 %s17, %s24
      %p78 = scmp.eq.s32.totalorder %s77, 0
      %s80 = sadd.s32 %s79, 1
      %s81 = scalar_select %p78, %s79, %s80
      %p84 = pneg %p78
      %p85 = scmp.eq.s32.totalorder %s17, 1
      %p86 = por %p84, %p85
      %p87 = scmp.ne.s32.totalorder %s79, %s82
      %p88 = scmp.eq.s32.totalorder %s17, 0
      %p89 = por %p87, %p88
      %p90 = scmp.ne.s32.totalorder %s79, %s82
      %p91 = scmp.eq.s32.totalorder %s22, 1
      %p92 = por %p90, %p91
      %p93 = scmp.ne.s32.totalorder %s82, %s83
      %p94 = scmp.eq.s32.totalorder %s22, 0
      %p95 = por %p93, %p94
      %p96 = scmp.ne.s32.totalorder %s82, %s83
      %p97 = scmp.eq.s32.totalorder %s23, 1
      %p98 = por %p96, %p97
      %p100 = scmp.ne.s32.totalorder %s83, %s99
      %p101 = scmp.eq.s32.totalorder %s23, 0
      %p102 = por %p100, %p101
      %s103 = ssub.s32 %s17, %s24
      %p104 = scmp.eq.s32.totalorder %s103, 0
      %s106 = sadd.s32 %s105, 1
      %s107 = scalar_select %p104, %s105, %s106
      %p110 = pneg %p104
      %p111 = scmp.eq.s32.totalorder %s17, 1
      %p112 = por %p110, %p111
      %p113 = scmp.ne.s32.totalorder %s105, %s108
      %p114 = scmp.eq.s32.totalorder %s17, 0
      %p115 = por %p113, %p114
      %p116 = scmp.ne.s32.totalorder %s105, %s108
      %p117 = scmp.eq.s32.totalorder %s22, 1
      %p118 = por %p116, %p117
      %p119 = scmp.ne.s32.totalorder %s108, %s109
      %p120 = scmp.eq.s32.totalorder %s22, 0
      %p121 = por %p119, %p120
      %p122 = scmp.ne.s32.totalorder %s108, %s109
      %p123 = scmp.eq.s32.totalorder %s23, 1
      %p124 = por %p122, %p123
      %p126 = scmp.ne.s32.totalorder %s109, %s125
      %p127 = scmp.eq.s32.totalorder %s23, 0
      %p128 = por %p126, %p127
      %s129 = ssub.s32 %s17, %s24
      %p130 = scmp.eq.s32.totalorder %s129, 0
      %s132 = sadd.s32 %s131, 1
      %s133 = scalar_select %p130, %s131, %s132
      %p136 = pneg %p130
      %p137 = scmp.eq.s32.totalorder %s17, 1
      %p138 = por %p136, %p137
      %p139 = scmp.ne.s32.totalorder %s131, %s134
      %p140 = scmp.eq.s32.totalorder %s17, 0
      %p141 = por %p139, %p140
      %p142 = scmp.ne.s32.totalorder %s131, %s134
      %p143 = scmp.eq.s32.totalorder %s22, 1
      %p144 = por %p142, %p143
      %p145 = scmp.ne.s32.totalorder %s134, %s135
      %p146 = scmp.eq.s32.totalorder %s22, 0
      %p147 = por %p145, %p146
      %p148 = scmp.ne.s32.totalorder %s134, %s135
      %p149 = scmp.eq.s32.totalorder %s23, 1
      %p150 = por %p148, %p149
      %p152 = scmp.ne.s32.totalorder %s135, %s151
      %p153 = scmp.eq.s32.totalorder %s23, 0
      %p154 = por %p152, %p153
      %s155 = ssub.s32 %s17, %s24
      %p156 = scmp.eq.s32.totalorder %s155, 0
      %s158 = sadd.s32 %s157, 1
      %s159 = scalar_select %p156, %s157, %s158
      %p162 = pneg %p156
      %p163 = scmp.eq.s32.totalorder %s17, 1
      %p164 = por %p162, %p163
      %p165 = scmp.ne.s32.totalorder %s157, %s160
      %p166 = scmp.eq.s32.totalorder %s17, 0
      %p167 = por %p165, %p166
      %p168 = scmp.ne.s32.totalorder %s157, %s160
      %p169 = scmp.eq.s32.totalorder %s22, 1
      %p170 = por %p168, %p169
      %p171 = scmp.ne.s32.totalorder %s160, %s161
      %p172 = scmp.eq.s32.totalorder %s22, 0
      %p173 = por %p171, %p172
      %p174 = scmp.ne.s32.totalorder %s160, %s161
      %p175 = scmp.eq.s32.totalorder %s23, 1
      %p176 = por %p174, %p175
      %p178 = scmp.ne.s32.totalorder %s161, %s177
      %p179 = scmp.eq.s32.totalorder %s23, 0
      %p180 = por %p178, %p179
      %p181 = scmp.le.s32.totalorder 1, %s17
      %p182 = scmp.lt.s32.totalorder %s17, 3
      %p183 = pnand %p181, %p182
      %p184 = pneg %p183
      // Predicated region
      $region9: #{tpu_custom_call.1} parent=5 // pred_check
        _
      $region10: #{tpu_custom_call.1} parent=5 // pred_check_branch
        %186 = sbr.rel (%p183) target = $region12
      $region11: #{tpu_custom_call.1} parent=5 // pred_region
        %s187 = ssub.s32 %s17, 1
      $region12: #{tpu_custom_call.1} parent=5 // pred_fallthru
        _
      %p188 = scmp.lt.s32.totalorder %s17, 2
      // Predicated region
      $region13: #{tpu_custom_call.1} parent=5 // pred_check
        %p189 = pneg %p188
      $region14: #{tpu_custom_call.1} parent=5 // pred_check_branch
        %191 = sbr.rel (%p189) target = $region16
      $region15: #{tpu_custom_call.1} parent=5 // pred_region
        // Predicated region
        $region17: #{tpu_custom_call.1} parent=15 // pred_check
          %p192 = pneg %p37
        $region18: #{tpu_custom_call.1} parent=15 // pred_check_branch
          %194 = sbr.rel (%p192) target = $region20
        $region19: #{tpu_custom_call.1} parent=15 // pred_region
          %p195 = scmp.lt.s32.totalorder %s17, 1
          %s196 = scalar_select %p195, %s17, 1
          %s197 = smul.addr %s196, 4
          %s198 = scalar_lea.vmem %s0, %s197
        $region20: #{tpu_custom_call.1} parent=15 // pred_fallthru
          _
        // Predicated region
        $region21: #{tpu_custom_call.1} parent=15 // pred_check
          %p199 = pneg %p63
        $region22: #{tpu_custom_call.1} parent=15 // pred_check_branch
          %201 = sbr.rel (%p199) target = $region24
        $region23: #{tpu_custom_call.1} parent=15 // pred_region
          %p202 = scmp.lt.s32.totalorder %s17, 1
          %s203 = scalar_select %p202, %s17, 1
          %s204 = smul.addr %s203, 4
          %s205 = scalar_lea.vmem %s1, %s204
        $region24: #{tpu_custom_call.1} parent=15 // pred_fallthru
          _
        // Predicated region
        $region25: #{tpu_custom_call.1} parent=15 // pred_check
          %p206 = pneg %p89
        $region26: #{tpu_custom_call.1} parent=15 // pred_check_branch
          %208 = sbr.rel (%p206) target = $region28
        $region27: #{tpu_custom_call.1} parent=15 // pred_region
          %s209 = sand.u32 %s79, 1
          %s210 = scalar_lea.sflag [#allocation3], %s209
          %s211 = sand.u32 %s79, 1
          %s212 = scalar_lea.vmem [#allocation2], %s211
          %s214 = ssub.s32 16, 16
          %215 = vsyncadd %s210, %s214
          %s216 = smul.addr %s17, 16
          %s217 = scalar_lea.hbm %s2, %s216
          %s219 = sshll.u32 %s212, 4
          %s220 = int_to_ptr.vmem [resolvable:$true] %s219
          %222 = dma.hbm_to_vmem [thread:$0]  %s217, 16, %s220, %s210
        $region28: #{tpu_custom_call.1} parent=15 // pred_fallthru
          _
        // Predicated region
        $region29: #{tpu_custom_call.1} parent=15 // pred_check
          %p223 = pneg %p115
        $region30: #{tpu_custom_call.1} parent=15 // pred_check_branch
          %225 = sbr.rel (%p223) target = $region32
        $region31: #{tpu_custom_call.1} parent=15 // pred_region
          %p226 = scmp.lt.s32.totalorder %s17, 1
          %s227 = scalar_select %p226, %s17, 1
          %s228 = scalar_lea.vmem %s3, %s227
        $region32: #{tpu_custom_call.1} parent=15 // pred_fallthru
          _
        // Predicated region
        $region33: #{tpu_custom_call.1} parent=15 // pred_check
          %p229 = pneg %p141
        $region34: #{tpu_custom_call.1} parent=15 // pred_check_branch
          %231 = sbr.rel (%p229) target = $region36
        $region35: #{tpu_custom_call.1} parent=15 // pred_region
          %p232 = scmp.lt.s32.totalorder %s17, 1
          %s233 = scalar_select %p232, %s17, 1
          %s234 = smul.addr %s233, 4
          %s235 = scalar_lea.vmem %s4, %s234
        $region36: #{tpu_custom_call.1} parent=15 // pred_fallthru
          _
      $region16: #{tpu_custom_call.1} parent=5 // pred_fallthru
        _
      %p236 = scmp.le.s32.totalorder 1, %s17
      %p237 = scmp.lt.s32.totalorder %s17, 3
      %p238 = pnand %p236, %p237
      %p239 = pneg %p238
      // Predicated region
      $region37: #{tpu_custom_call.1} parent=5 // pred_check
        _
      $region38: #{tpu_custom_call.1} parent=5 // pred_check_branch
        %241 = sbr.rel (%p238) target = $region40
      $region39: #{tpu_custom_call.1} parent=5 // pred_region
        %s242 = ssub.s32 %s17, 1
        %s243 = sand.u32 %s82, 1
        %s244 = scalar_lea.sflag [#allocation3], %s243
        %s245 = sand.u32 %s82, 1
        %s246 = scalar_lea.vmem [#allocation2], %s245
        // Predicated region
        $region41: #{tpu_custom_call.1} parent=39 // pred_check
          %p247 = pneg %p95
        $region42: #{tpu_custom_call.1} parent=39 // pred_check_branch
          %249 = sbr.rel (%p247) target = $region44
        $region43: #{tpu_custom_call.1} parent=39 // pred_region
          %250 = dma.done %s244, 16
        $region44: #{tpu_custom_call.1} parent=39 // pred_fallthru
          _
        %p251 = scmp.lt.s32.totalorder %s22, 1
        %s252 = scalar_select %p251, %s22, 1
        %s253 = smul.addr %s252, 4
        %s254 = scalar_lea.vmem %s0, %s253
        %p255 = pneg %p43
        %p256 = pneg %p40
        %p257 = scmp.lt.s32.totalorder %s22, 1
        %s258 = scalar_select %p257, %s22, 1
        %s259 = smul.addr %s258, 4
        %s260 = scalar_lea.vmem %s1, %s259
        %p261 = pneg %p69
        %p262 = pneg %p66
        %s263 = sand.u32 %s82, 1
        %s264 = scalar_lea.sflag [#allocation3], %s263
        %s265 = sand.u32 %s82, 1
        %s266 = scalar_lea.vmem [#allocation2], %s265
        %p267 = pneg %p95
        %p268 = pneg %p92
        %p269 = scmp.lt.s32.totalorder %s22, 1
        %s270 = scalar_select %p269, %s22, 1
        %s271 = scalar_lea.vmem %s3, %s270
        %p272 = pneg %p121
        %p273 = pneg %p118
        %p274 = scmp.lt.s32.totalorder %s22, 1
        %s275 = scalar_select %p274, %s22, 1
        %s276 = smul.addr %s275, 4
        %s277 = scalar_lea.vmem %s4, %s276
        %p278 = pneg %p147
        %p279 = pneg %p144
        %p280 = pneg %p173
        %p281 = pneg %p170
        %s282 = sand.u32 %s160, 1
        %s283 = scalar_lea.sflag [#allocation4], %s282
        %s284 = sand.u32 %s160, 1
        %s285 = smul.addr %s284, 4
        %s286 = scalar_lea.vmem [#allocation5], %s285
        %p287 = scmp.lt.s32.totalorder %s22, 1
        %s288 = scalar_select %p287, %s22, 1
        %s289 = smul.addr %s288, 4
        %s290 = scalar_lea.vmem %s0, %s289
        %p291 = scmp.lt.s32.totalorder %s22, 1
        %s292 = scalar_select %p291, %s22, 1
        %s293 = smul.addr %s292, 4
        %s294 = scalar_lea.vmem %s1, %s293
        %p295 = scmp.lt.s32.totalorder %s22, 1
        %s296 = scalar_select %p295, %s22, 1
        %s297 = scalar_lea.vmem %s3, %s296
        %p298 = scmp.lt.s32.totalorder %s22, 1
        %s299 = scalar_select %p298, %s22, 1
        %s300 = smul.addr %s299, 4
        %s301 = scalar_lea.vmem %s4, %s300
        %v302 = vld [vmem:[%s290] sm:$0xf]
        %v303 = vld [vmem:[%s294] sm:$0xf]
        %v304 = vld [vmem:[%s246] sm:$0x1]
        %v305 = vld [vmem:[%s301] sm:$0xf]
        %vm306 = vcmp.eq.s32.totalorder %v304, 0
        %v307 = vsel %vm306, 1, 0
        %v308 = vlaneseq
        %v309 = vshrl.u32 %v308, 7
        %v310 = vsub.s32 0, %v309
        %v311 = vrot.slane %v307, %v310
        %vm312 = vcmp.eq.s32.totalorder %v311, 1
        %314 = vset.pattern.permute.xlu0 0
        %315 = vperm.xlu0 %314, %v303
        %v316 = vpop.permute.xlu0 %315
        %v318 = vsel %vm312, %v316, 0.0
        %vm319 = vcmp.eq.s32.totalorder %v304, 1
        %v320 = vsel %vm319, 1, 0
        %v321 = vlaneseq
        %v322 = vshrl.u32 %v321, 7
        %v323 = vsub.s32 0, %v322
        %v324 = vrot.slane %v320, %v323
        %vm325 = vcmp.eq.s32.totalorder %v324, 1
        %326 = vset.pattern.permute.xlu0 1
        %327 = vperm.xlu0 %326, %v303
        %v328 = vpop.permute.xlu0 %327
        %v330 = vsel %vm325, %v328, %v318
        %vm331 = vcmp.eq.s32.totalorder %v304, 2
        %v332 = vsel %vm331, 1, 0
        %v333 = vlaneseq
        %v334 = vshrl.u32 %v333, 7
        %v335 = vsub.s32 0, %v334
        %v336 = vrot.slane %v332, %v335
        %vm337 = vcmp.eq.s32.totalorder %v336, 1
        %338 = vset.pattern.permute.xlu0 2
        %339 = vperm.xlu0 %338, %v303
        %v340 = vpop.permute.xlu0 %339
        %v342 = vsel %vm337, %v340, %v330
        %vm343 = vcmp.eq.s32.totalorder %v304, 3
        %v344 = vsel %vm343, 1, 0
        %v345 = vlaneseq
        %v346 = vshrl.u32 %v345, 7
        %v347 = vsub.s32 0, %v346
        %v348 = vrot.slane %v344, %v347
        %vm349 = vcmp.eq.s32.totalorder %v348, 1
        %350 = vset.pattern.permute.xlu0 3
        %351 = vperm.xlu0 %350, %v303
        %v352 = vpop.permute.xlu0 %351
        %v354 = vsel %vm349, %v352, %v342
        %vm355 = vcmp.eq.s32.totalorder %v304, 4
        %v356 = vsel %vm355, 1, 0
        %v357 = vlaneseq
        %v358 = vshrl.u32 %v357, 7
        %v359 = vsub.s32 0, %v358
        %v360 = vrot.slane %v356, %v359
        %vm361 = vcmp.eq.s32.totalorder %v360, 1
        %362 = vset.pattern.permute.xlu0 4
        %363 = vperm.xlu0 %362, %v303
        %v364 = vpop.permute.xlu0 %363
        %v366 = vsel %vm361, %v364, %v354
        %368 = vset.pattern.permute.xlu0 0
        %369 = vperm.xlu0 %368, %v302
        %v370 = vpop.permute.xlu0 %369
        %v372 = vrcp.pop %v370
        %v373 = vmul.f32 %v366, %v372
        %v374 = vld [vmem:[%s297] sm:$0x1]
        %v375 = vcvt.s32.f32 %v374
        %v376 = vmul.f32 %v375, -0.052680258
        %v377 = vmul.f32 %v376, 1.442695
        %v378 = vpow.pop %v377
        %v379 = vmul.f32 %v378, %v378
        %v380 = vsub.f32 1.0, %v379
        %v381 = vmax.f32 %v380, 0.0
        %v382 = vrsqrt.pop %v381
        %v383 = vmul.f32 %v381, %v382
        %vm384 = vcmp.eq.f32.partialorder %v381, inf
        %v385 = vsel %vm384, %v381, %v383
        %vm386 = vcmp.eq.f32.partialorder %v381, 0.0
        %v387 = vand.u32 %v381, 2147483648
        %v388 = vsel %vm386, %v387, %v385
        %v390 = vlaneseq
        %v391 = vshrl.u32 %v390, 7
        %v392 = vsub.s32 0, %v391
        %v393 = vrot.slane %v378, %v392
        %v395 = vmul.f32 %v373, %v393
        %v397 = vlaneseq
        %v398 = vshrl.u32 %v397, 7
        %v399 = vsub.s32 0, %v398
        %v400 = vrot.slane %v388, %v399
        %v402 = vmul.f32 %v305, %v400
        %v403 = vadd.f32 %v395, %v402
        %v404 = vmul.f32 %v370, %v403
        %405 = vst [vmem:[%s286] sm:$0xf] %v404
        %s406 = sand.u32 %s160, 1
        %s407 = scalar_lea.sflag [#allocation4], %s406
        %s408 = sand.u32 %s160, 1
        %s409 = smul.addr %s408, 4
        %s410 = scalar_lea.vmem [#allocation5], %s409
        // Predicated region
        $region45: #{tpu_custom_call.1} parent=39 // pred_check
          %p411 = pneg %p170
        $region46: #{tpu_custom_call.1} parent=39 // pred_check_branch
          %413 = sbr.rel (%p411) target = $region48
        $region47: #{tpu_custom_call.1} parent=39 // pred_region
          %s415 = ssub.s32 64, 64
          %416 = vsyncadd %s407, %s415
          %s417 = smul.addr %s22, 64
          %s418 = scalar_lea.hbm %s5, %s417
          %s420 = sshll.u32 %s410, 4
          %s421 = int_to_ptr.vmem [resolvable:$true] %s420
          %423 = dma.vmem_to_hbm [thread:$0]  %s421, 64, %s418, %s407
        $region48: #{tpu_custom_call.1} parent=39 // pred_fallthru
          _
      $region40: #{tpu_custom_call.1} parent=5 // pred_fallthru
        _
      %p424 = scmp.le.s32.totalorder 2, %s17
      // Predicated region
      $region49: #{tpu_custom_call.1} parent=5 // pred_check
        %p425 = pneg %p424
      $region50: #{tpu_custom_call.1} parent=5 // pred_check_branch
        %427 = sbr.rel (%p425) target = $region52
      $region51: #{tpu_custom_call.1} parent=5 // pred_region
        %s428 = ssub.s32 %s17, 2
        // Predicated region
        $region53: #{tpu_custom_call.1} parent=51 // pred_check
          %p429 = pneg %p176
        $region54: #{tpu_custom_call.1} parent=51 // pred_check_branch
          %431 = sbr.rel (%p429) target = $region56
        $region55: #{tpu_custom_call.1} parent=51 // pred_region
          %s432 = sand.u32 %s161, 1
          %s433 = scalar_lea.sflag [#allocation4], %s432
          %s434 = sand.u32 %s161, 1
          %s435 = smul.addr %s434, 4
          %s436 = scalar_lea.vmem [#allocation5], %s435
          %437 = dma.done %s433, 64
        $region56: #{tpu_custom_call.1} parent=51 // pred_fallthru
          _
      $region52: #{tpu_custom_call.1} parent=5 // pred_fallthru
        _
    $region6: #{tpu_custom_call.1} parent=1 // loop_footer
      %s21 = sadd.s32 1, %s17
    $region7: #{tpu_custom_call.1} parent=1 // loop_footer_branch
      %16 = sbr.rel target = $region3
    $region8: #{tpu_custom_call.1} parent=1 // loop_exit
      _
    %438 = vsyncpa [#allocation3], 1
    %s439 = scalar_lea.sflag [#allocation3], 1
    %440 = vsyncpa %s439, 1
    %441 = vsyncpa [#allocation4], 1
    %s442 = scalar_lea.sflag [#allocation4], 1
    %443 = vsyncpa %s442, 1

</llo_original>
